<compile_context>
chip_gen: v7x
topology: tpu7x:2x2x1
jax: 0.10.0
libtpu: 0.0.40
codegen_flags: <defaults>
</compile_context>

<pallas_src>
import jax
import jax.numpy as jnp
import numpy as np
from jax.experimental import pallas as pl
from jax.experimental.pallas import tpu as pltpu

HIDDEN_SIZE = 1
SEQ_LEN_IN = 5
SEQ_LEN_OUT = 8

_CW = 256                 # lane width of one in-register chunk
_UNIT = 8 * _CW           # batch elements per chunk (8 sublanes x 256 lanes)


def _round_up(n, m):
    return ((n + m - 1) // m) * m


def elman_rnn_kernel(params_ref, x_ref, y_ref):
    # params_ref: SMEM f32[5] = [w_x, w_h, b_i2h, w_o, b_o]   (scalar prefetch)
    # x_ref:      VMEM f32[SEQ_LEN_IN,  n_chunks, 8, _CW]
    # y_ref:      VMEM f32[SEQ_LEN_OUT, n_chunks, 8, _CW]
    n_chunks = x_ref.shape[1]
    cshape = (x_ref.shape[2], x_ref.shape[3])          # (8, _CW) -> 2 vregs

    # Hoist scalar -> vector broadcasts out of all loops (JAX doesn't CSE them).
    w_x = jnp.full(cshape, params_ref[0], jnp.float32)
    w_h = jnp.full(cshape, params_ref[1], jnp.float32)
    b_i = jnp.full(cshape, params_ref[2], jnp.float32)
    w_o = jnp.full(cshape, params_ref[3], jnp.float32)
    b_o = jnp.full(cshape, params_ref[4], jnp.float32)

    @pl.loop(0, n_chunks)
    def _(c):
        hidden = jnp.zeros(cshape, jnp.float32)
        # Encoder: hidden = tanh(w_x*x_i + w_h*h + b); reads straight from ref.
        for i in range(SEQ_LEN_IN):
            xi = x_ref[i, c]
            hidden = jnp.tanh(xi * w_x + hidden * w_h + b_i)
        # Decoder: y_0 = h2o(hidden); feed y back through i2h. Each output row
        # is stored to y_ref the moment it is produced (lane-dense full tile).
        y_prev = hidden * w_o + b_o
        y_ref[0, c] = y_prev
        for i in range(1, SEQ_LEN_OUT):
            hidden = jnp.tanh(y_prev * w_x + hidden * w_h + b_i)
            y_prev = hidden * w_o + b_o
            y_ref[i, c] = y_prev


def elman_rnn_forward(x, w_i2h, b_i2h, w_h2o, b_h2o, *,
                      target_grid_steps=2, max_tile_b=128 * 1024):
    """x: (B, SEQ_LEN_IN, 1) -> (B, SEQ_LEN_OUT, 1), matching Elman_RNN.forward."""
    B = x.shape[0]
    assert x.shape == (B, SEQ_LEN_IN, 1)

    # --- Tile sizing: the whole padded batch in >= target_grid_steps aligned
    # tiles (so v7x's two TCs both get a tile), capped by a VMEM budget
    # (~52 B/lane per buffer, ~13.6 MB double-buffered at the cap -> fits the
    # 32 MiB scoped-VMEM default on every generation).
    B_min = _round_up(B, _UNIT)
    if B_min >= target_grid_steps * _UNIT:
        tile_b = _round_up(-(-B_min // target_grid_steps), _UNIT)
    else:
        tile_b = B_min
    tile_b = min(tile_b, _round_up(max_tile_b, _UNIT))
    B_pad = _round_up(B, tile_b)
    nc_total = B_pad // _UNIT
    nc_block = tile_b // _UNIT

    # --- Layout plumbing: time major, batch folded onto (chunk, sublane, lane).
    # Padded columns are zeros; they're computed on but sliced away below.
    x2d = jnp.transpose(x[..., 0].astype(jnp.float32))        # (SEQ_LEN_IN, B)
    if B_pad != B:
        x2d = jnp.pad(x2d, ((0, 0), (0, B_pad - B)))
    x4d = x2d.reshape(SEQ_LEN_IN, nc_total, 8, _CW)

    # cat(x_i, hidden) order => column 0 of w_i2h multiplies x, column 1 hidden.
    params = jnp.array(
        [w_i2h[0, 0], w_i2h[0, 1], b_i2h[0], w_h2o[0, 0], b_h2o[0]],
        dtype=jnp.float32,
    )

    y4d = pl.pallas_call(
        elman_rnn_kernel,
        out_shape=jax.ShapeDtypeStruct((SEQ_LEN_OUT, nc_total, 8, _CW),
                                       jnp.float32),
        grid_spec=pltpu.PrefetchScalarGridSpec(
            num_scalar_prefetch=1,
            grid=(B_pad // tile_b,),
            in_specs=[pl.BlockSpec((SEQ_LEN_IN, nc_block, 8, _CW),
                                   lambda b, p: (0, b, 0, 0))],
            out_specs=pl.BlockSpec((SEQ_LEN_OUT, nc_block, 8, _CW),
                                   lambda b, p: (0, b, 0, 0)),
        ),
        compiler_params=pltpu.CompilerParams(
            dimension_semantics=("parallel",)),
    )(params, x4d)

    y2d = y4d.reshape(SEQ_LEN_OUT, B_pad)
    # TODO(synk): output stays time-major; the final transpose back to
    # (B, SEQ_LEN_OUT, 1) lives in the wrapper (an in-kernel lane->sublane
    # transpose would need masked 8-wide stores and isn't worth the risk).
    return jnp.transpose(y2d[:, :B])[:, :, None]


def elman_rnn_ref(x, w_i2h, b_i2h, w_h2o, b_h2o):
    """Pure-JAX reference mirroring the PyTorch forward."""
    B = x.shape[0]
    hidden = jnp.zeros((B, HIDDEN_SIZE), jnp.float32)
    for i in range(SEQ_LEN_IN):
        combined = jnp.concatenate([x[:, i, :], hidden], axis=1)
        hidden = jnp.tanh(combined @ w_i2h.T + b_i2h)
    ys = [hidden @ w_h2o.T + b_h2o]
    for i in range(SEQ_LEN_OUT - 1):
        combined = jnp.concatenate([ys[i], hidden], axis=1)
        hidden = jnp.tanh(combined @ w_i2h.T + b_i2h)
        ys.append(hidden @ w_h2o.T + b_h2o)
    return jnp.stack(ys, axis=1)                             # (B, SEQ_LEN_OUT, 1)


if __name__ == "__main__":
    key = jax.random.PRNGKey(0)
    k_x, k_wi, k_bi, k_wo, k_bo = jax.random.split(key, 5)

    # Deterministic parameter init following torch.nn.Linear's U(-1/sqrt(fan_in), +)
    bound_i2h = 1.0 / np.sqrt(1 + HIDDEN_SIZE)
    bound_h2o = 1.0 / np.sqrt(HIDDEN_SIZE)
    w_i2h = jax.random.uniform(k_wi, (HIDDEN_SIZE, 1 + HIDDEN_SIZE),
                               minval=-bound_i2h, maxval=bound_i2h, dtype=jnp.float32)
    b_i2h = jax.random.uniform(k_bi, (HIDDEN_SIZE,),
                               minval=-bound_i2h, maxval=bound_i2h, dtype=jnp.float32)
    w_h2o = jax.random.uniform(k_wo, (1, HIDDEN_SIZE),
                               minval=-bound_h2o, maxval=bound_h2o, dtype=jnp.float32)
    b_h2o = jax.random.uniform(k_bo, (1,),
                               minval=-bound_h2o, maxval=bound_h2o, dtype=jnp.float32)

    # Small-shape check (matches the module spec).
    B = 4
    x = jax.random.normal(k_x, (B, SEQ_LEN_IN, 1), dtype=jnp.float32)
    y = jax.block_until_ready(elman_rnn_forward(x, w_i2h, b_i2h, w_h2o, b_h2o))
    y_ref = elman_rnn_ref(x, w_i2h, b_i2h, w_h2o, b_h2o)
    np.testing.assert_allclose(np.asarray(y), np.asarray(y_ref), rtol=1e-5, atol=1e-5)
    assert y.shape == (B, SEQ_LEN_OUT, 1)

    # Padding path (non-multiple of the 2048-element chunk unit), single tile.
    B2 = 300
    x2 = jax.random.normal(k_x, (B2, SEQ_LEN_IN, 1), dtype=jnp.float32)
    y2 = jax.block_until_ready(elman_rnn_forward(x2, w_i2h, b_i2h, w_h2o, b_h2o))
    y2_ref = elman_rnn_ref(x2, w_i2h, b_i2h, w_h2o, b_h2o)
    np.testing.assert_allclose(np.asarray(y2), np.asarray(y2_ref), rtol=1e-5, atol=1e-5)
    assert y2.shape == (B2, SEQ_LEN_OUT, 1)

    # Multi-tile parallel grid + in-kernel chunk loop path.
    B3 = 5000
    x3 = jax.random.normal(k_x, (B3, SEQ_LEN_IN, 1), dtype=jnp.float32)
    y3 = jax.block_until_ready(elman_rnn_forward(x3, w_i2h, b_i2h, w_h2o, b_h2o))
    y3_ref = elman_rnn_ref(x3, w_i2h, b_i2h, w_h2o, b_h2o)
    np.testing.assert_allclose(np.asarray(y3), np.asarray(y3_ref), rtol=1e-5, atol=1e-5)
    assert y3.shape == (B3, SEQ_LEN_OUT, 1)

    print("KERNEL_OK")
</pallas_src>

<mosaic_0001>
module attributes {stable_mosaic.version = 11 : i64} {
  func.func @elman_rnn_kernel(%arg0: i32, %arg1: memref<5xf32, #tpu.memory_space<smem>>, %arg2: memref<5x1x8x256xf32, #tpu.memory_space<vmem>>, %arg3: memref<8x1x8x256xf32, #tpu.memory_space<vmem>>) attributes {dimension_semantics = [#tpu.dimension_semantics<parallel>], iteration_bounds = array<i64: 1>, scalar_prefetch = 1 : i64, scratch_operands = 0 : i64, tpu.core_type = #tpu.core_type<tc>, window_params = [{transform_indices = @transform_0, window_bounds = array<i64: 5, 1, 8, 256>}, {transform_indices = @transform_1, window_bounds = array<i64: 8, 1, 8, 256>}]} {
    %c0 = arith.constant 0 : index
    %0 = memref.load %arg1[%c0] : memref<5xf32, #tpu.memory_space<smem>>
    %1 = vector.broadcast %0 : f32 to vector<8x256xf32>
    %c1 = arith.constant 1 : index
    %2 = memref.load %arg1[%c1] : memref<5xf32, #tpu.memory_space<smem>>
    %3 = vector.broadcast %2 : f32 to vector<8x256xf32>
    %c2 = arith.constant 2 : index
    %4 = memref.load %arg1[%c2] : memref<5xf32, #tpu.memory_space<smem>>
    %5 = vector.broadcast %4 : f32 to vector<8x256xf32>
    %c3 = arith.constant 3 : index
    %6 = memref.load %arg1[%c3] : memref<5xf32, #tpu.memory_space<smem>>
    %7 = vector.broadcast %6 : f32 to vector<8x256xf32>
    %c4 = arith.constant 4 : index
    %8 = memref.load %arg1[%c4] : memref<5xf32, #tpu.memory_space<smem>>
    %9 = vector.broadcast %8 : f32 to vector<8x256xf32>
    %c0_i32 = arith.constant 0 : i32
    %c1_i32 = arith.constant 1 : i32
    %10 = arith.muli %c0_i32, %c1_i32 : i32
    %c0_i32_0 = arith.constant 0 : i32
    %11 = arith.addi %c0_i32_0, %10 : i32
    %cst = arith.constant 0.000000e+00 : f32
    %12 = vector.broadcast %cst : f32 to vector<8x256xf32>
    %c0_1 = arith.constant 0 : index
    %13 = arith.index_cast %11 : i32 to index
    %c0_2 = arith.constant 0 : index
    %c0_3 = arith.constant 0 : index
    %14 = vector.load %arg2[%c0_1, %13, %c0_2, %c0_3] : memref<5x1x8x256xf32, #tpu.memory_space<vmem>>, vector<1x1x8x256xf32>
    %15 = vector.shape_cast %14 : vector<1x1x8x256xf32> to vector<8x256xf32>
    %16 = arith.mulf %15, %1 : vector<8x256xf32>
    %17 = arith.mulf %12, %3 : vector<8x256xf32>
    %18 = arith.addf %16, %17 : vector<8x256xf32>
    %19 = arith.addf %18, %5 : vector<8x256xf32>
    %20 = math.tanh %19 : vector<8x256xf32>
    %c1_4 = arith.constant 1 : index
    %21 = arith.index_cast %11 : i32 to index
    %c0_5 = arith.constant 0 : index
    %c0_6 = arith.constant 0 : index
    %22 = vector.load %arg2[%c1_4, %21, %c0_5, %c0_6] : memref<5x1x8x256xf32, #tpu.memory_space<vmem>>, vector<1x1x8x256xf32>
    %23 = vector.shape_cast %22 : vector<1x1x8x256xf32> to vector<8x256xf32>
    %24 = arith.mulf %23, %1 : vector<8x256xf32>
    %25 = arith.mulf %20, %3 : vector<8x256xf32>
    %26 = arith.addf %24, %25 : vector<8x256xf32>
    %27 = arith.addf %26, %5 : vector<8x256xf32>
    %28 = math.tanh %27 : vector<8x256xf32>
    %c2_7 = arith.constant 2 : index
    %29 = arith.index_cast %11 : i32 to index
    %c0_8 = arith.constant 0 : index
    %c0_9 = arith.constant 0 : index
    %30 = vector.load %arg2[%c2_7, %29, %c0_8, %c0_9] : memref<5x1x8x256xf32, #tpu.memory_space<vmem>>, vector<1x1x8x256xf32>
    %31 = vector.shape_cast %30 : vector<1x1x8x256xf32> to vector<8x256xf32>
    %32 = arith.mulf %31, %1 : vector<8x256xf32>
    %33 = arith.mulf %28, %3 : vector<8x256xf32>
    %34 = arith.addf %32, %33 : vector<8x256xf32>
    %35 = arith.addf %34, %5 : vector<8x256xf32>
    %36 = math.tanh %35 : vector<8x256xf32>
    %c3_10 = arith.constant 3 : index
    %37 = arith.index_cast %11 : i32 to index
    %c0_11 = arith.constant 0 : index
    %c0_12 = arith.constant 0 : index
    %38 = vector.load %arg2[%c3_10, %37, %c0_11, %c0_12] : memref<5x1x8x256xf32, #tpu.memory_space<vmem>>, vector<1x1x8x256xf32>
    %39 = vector.shape_cast %38 : vector<1x1x8x256xf32> to vector<8x256xf32>
    %40 = arith.mulf %39, %1 : vector<8x256xf32>
    %41 = arith.mulf %36, %3 : vector<8x256xf32>
    %42 = arith.addf %40, %41 : vector<8x256xf32>
    %43 = arith.addf %42, %5 : vector<8x256xf32>
    %44 = math.tanh %43 : vector<8x256xf32>
    %c4_13 = arith.constant 4 : index
    %45 = arith.index_cast %11 : i32 to index
    %c0_14 = arith.constant 0 : index
    %c0_15 = arith.constant 0 : index
    %46 = vector.load %arg2[%c4_13, %45, %c0_14, %c0_15] : memref<5x1x8x256xf32, #tpu.memory_space<vmem>>, vector<1x1x8x256xf32>
    %47 = vector.shape_cast %46 : vector<1x1x8x256xf32> to vector<8x256xf32>
    %48 = arith.mulf %47, %1 : vector<8x256xf32>
    %49 = arith.mulf %44, %3 : vector<8x256xf32>
    %50 = arith.addf %48, %49 : vector<8x256xf32>
    %51 = arith.addf %50, %5 : vector<8x256xf32>
    %52 = math.tanh %51 : vector<8x256xf32>
    %53 = arith.mulf %52, %7 : vector<8x256xf32>
    %54 = arith.addf %53, %9 : vector<8x256xf32>
    %c0_16 = arith.constant 0 : index
    %55 = arith.index_cast %11 : i32 to index
    %c0_17 = arith.constant 0 : index
    %c0_18 = arith.constant 0 : index
    %56 = vector.load %arg3[%c0_16, %55, %c0_17, %c0_18] : memref<8x1x8x256xf32, #tpu.memory_space<vmem>>, vector<1x1x8x256xf32>
    %57 = vector.shape_cast %56 : vector<1x1x8x256xf32> to vector<8x256xf32>
    %58 = vector.shape_cast %54 : vector<8x256xf32> to vector<1x1x8x256xf32>
    tpu.vector_store %arg3[%c0_16, %55, %c0_17, %c0_18], %58 {strides = array<i32>} : memref<8x1x8x256xf32, #tpu.memory_space<vmem>>, vector<1x1x8x256xf32>,
    %59 = arith.mulf %54, %1 : vector<8x256xf32>
    %60 = arith.mulf %52, %3 : vector<8x256xf32>
    %61 = arith.addf %59, %60 : vector<8x256xf32>
    %62 = arith.addf %61, %5 : vector<8x256xf32>
    %63 = math.tanh %62 : vector<8x256xf32>
    %64 = arith.mulf %63, %7 : vector<8x256xf32>
    %65 = arith.addf %64, %9 : vector<8x256xf32>
    %c1_19 = arith.constant 1 : index
    %66 = arith.index_cast %11 : i32 to index
    %c0_20 = arith.constant 0 : index
    %c0_21 = arith.constant 0 : index
    %67 = vector.load %arg3[%c1_19, %66, %c0_20, %c0_21] : memref<8x1x8x256xf32, #tpu.memory_space<vmem>>, vector<1x1x8x256xf32>
    %68 = vector.shape_cast %67 : vector<1x1x8x256xf32> to vector<8x256xf32>
    %69 = vector.shape_cast %65 : vector<8x256xf32> to vector<1x1x8x256xf32>
    tpu.vector_store %arg3[%c1_19, %66, %c0_20, %c0_21], %69 {strides = array<i32>} : memref<8x1x8x256xf32, #tpu.memory_space<vmem>>, vector<1x1x8x256xf32>,
    %70 = arith.mulf %65, %1 : vector<8x256xf32>
    %71 = arith.mulf %63, %3 : vector<8x256xf32>
    %72 = arith.addf %70, %71 : vector<8x256xf32>
    %73 = arith.addf %72, %5 : vector<8x256xf32>
    %74 = math.tanh %73 : vector<8x256xf32>
    %75 = arith.mulf %74, %7 : vector<8x256xf32>
    %76 = arith.addf %75, %9 : vector<8x256xf32>
    %c2_22 = arith.constant 2 : index
    %77 = arith.index_cast %11 : i32 to index
    %c0_23 = arith.constant 0 : index
    %c0_24 = arith.constant 0 : index
    %78 = vector.load %arg3[%c2_22, %77, %c0_23, %c0_24] : memref<8x1x8x256xf32, #tpu.memory_space<vmem>>, vector<1x1x8x256xf32>
    %79 = vector.shape_cast %78 : vector<1x1x8x256xf32> to vector<8x256xf32>
    %80 = vector.shape_cast %76 : vector<8x256xf32> to vector<1x1x8x256xf32>
    tpu.vector_store %arg3[%c2_22, %77, %c0_23, %c0_24], %80 {strides = array<i32>} : memref<8x1x8x256xf32, #tpu.memory_space<vmem>>, vector<1x1x8x256xf32>,
    %81 = arith.mulf %76, %1 : vector<8x256xf32>
    %82 = arith.mulf %74, %3 : vector<8x256xf32>
    %83 = arith.addf %81, %82 : vector<8x256xf32>
    %84 = arith.addf %83, %5 : vector<8x256xf32>
    %85 = math.tanh %84 : vector<8x256xf32>
    %86 = arith.mulf %85, %7 : vector<8x256xf32>
    %87 = arith.addf %86, %9 : vector<8x256xf32>
    %c3_25 = arith.constant 3 : index
    %88 = arith.index_cast %11 : i32 to index
    %c0_26 = arith.constant 0 : index
    %c0_27 = arith.constant 0 : index
    %89 = vector.load %arg3[%c3_25, %88, %c0_26, %c0_27] : memref<8x1x8x256xf32, #tpu.memory_space<vmem>>, vector<1x1x8x256xf32>
    %90 = vector.shape_cast %89 : vector<1x1x8x256xf32> to vector<8x256xf32>
    %91 = vector.shape_cast %87 : vector<8x256xf32> to vector<1x1x8x256xf32>
    tpu.vector_store %arg3[%c3_25, %88, %c0_26, %c0_27], %91 {strides = array<i32>} : memref<8x1x8x256xf32, #tpu.memory_space<vmem>>, vector<1x1x8x256xf32>,
    %92 = arith.mulf %87, %1 : vector<8x256xf32>
    %93 = arith.mulf %85, %3 : vector<8x256xf32>
    %94 = arith.addf %92, %93 : vector<8x256xf32>
    %95 = arith.addf %94, %5 : vector<8x256xf32>
    %96 = math.tanh %95 : vector<8x256xf32>
    %97 = arith.mulf %96, %7 : vector<8x256xf32>
    %98 = arith.addf %97, %9 : vector<8x256xf32>
    %c4_28 = arith.constant 4 : index
    %99 = arith.index_cast %11 : i32 to index
    %c0_29 = arith.constant 0 : index
    %c0_30 = arith.constant 0 : index
    %100 = vector.load %arg3[%c4_28, %99, %c0_29, %c0_30] : memref<8x1x8x256xf32, #tpu.memory_space<vmem>>, vector<1x1x8x256xf32>
    %101 = vector.shape_cast %100 : vector<1x1x8x256xf32> to vector<8x256xf32>
    %102 = vector.shape_cast %98 : vector<8x256xf32> to vector<1x1x8x256xf32>
    tpu.vector_store %arg3[%c4_28, %99, %c0_29, %c0_30], %102 {strides = array<i32>} : memref<8x1x8x256xf32, #tpu.memory_space<vmem>>, vector<1x1x8x256xf32>,
    %103 = arith.mulf %98, %1 : vector<8x256xf32>
    %104 = arith.mulf %96, %3 : vector<8x256xf32>
    %105 = arith.addf %103, %104 : vector<8x256xf32>
    %106 = arith.addf %105, %5 : vector<8x256xf32>
    %107 = math.tanh %106 : vector<8x256xf32>
    %108 = arith.mulf %107, %7 : vector<8x256xf32>
    %109 = arith.addf %108, %9 : vector<8x256xf32>
    %c5 = arith.constant 5 : index
    %110 = arith.index_cast %11 : i32 to index
    %c0_31 = arith.constant 0 : index
    %c0_32 = arith.constant 0 : index
    %111 = vector.load %arg3[%c5, %110, %c0_31, %c0_32] : memref<8x1x8x256xf32, #tpu.memory_space<vmem>>, vector<1x1x8x256xf32>
    %112 = vector.shape_cast %111 : vector<1x1x8x256xf32> to vector<8x256xf32>
    %113 = vector.shape_cast %109 : vector<8x256xf32> to vector<1x1x8x256xf32>
    tpu.vector_store %arg3[%c5, %110, %c0_31, %c0_32], %113 {strides = array<i32>} : memref<8x1x8x256xf32, #tpu.memory_space<vmem>>, vector<1x1x8x256xf32>,
    %114 = arith.mulf %109, %1 : vector<8x256xf32>
    %115 = arith.mulf %107, %3 : vector<8x256xf32>
    %116 = arith.addf %114, %115 : vector<8x256xf32>
    %117 = arith.addf %116, %5 : vector<8x256xf32>
    %118 = math.tanh %117 : vector<8x256xf32>
    %119 = arith.mulf %118, %7 : vector<8x256xf32>
    %120 = arith.addf %119, %9 : vector<8x256xf32>
    %c6 = arith.constant 6 : index
    %121 = arith.index_cast %11 : i32 to index
    %c0_33 = arith.constant 0 : index
    %c0_34 = arith.constant 0 : index
    %122 = vector.load %arg3[%c6, %121, %c0_33, %c0_34] : memref<8x1x8x256xf32, #tpu.memory_space<vmem>>, vector<1x1x8x256xf32>
    %123 = vector.shape_cast %122 : vector<1x1x8x256xf32> to vector<8x256xf32>
    %124 = vector.shape_cast %120 : vector<8x256xf32> to vector<1x1x8x256xf32>
    tpu.vector_store %arg3[%c6, %121, %c0_33, %c0_34], %124 {strides = array<i32>} : memref<8x1x8x256xf32, #tpu.memory_space<vmem>>, vector<1x1x8x256xf32>,
    %125 = arith.mulf %120, %1 : vector<8x256xf32>
    %126 = arith.mulf %118, %3 : vector<8x256xf32>
    %127 = arith.addf %125, %126 : vector<8x256xf32>
    %128 = arith.addf %127, %5 : vector<8x256xf32>
    %129 = math.tanh %128 : vector<8x256xf32>
    %130 = arith.mulf %129, %7 : vector<8x256xf32>
    %131 = arith.addf %130, %9 : vector<8x256xf32>
    %c7 = arith.constant 7 : index
    %132 = arith.index_cast %11 : i32 to index
    %c0_35 = arith.constant 0 : index
    %c0_36 = arith.constant 0 : index
    %133 = vector.load %arg3[%c7, %132, %c0_35, %c0_36] : memref<8x1x8x256xf32, #tpu.memory_space<vmem>>, vector<1x1x8x256xf32>
    %134 = vector.shape_cast %133 : vector<1x1x8x256xf32> to vector<8x256xf32>
    %135 = vector.shape_cast %131 : vector<8x256xf32> to vector<1x1x8x256xf32>
    tpu.vector_store %arg3[%c7, %132, %c0_35, %c0_36], %135 {strides = array<i32>} : memref<8x1x8x256xf32, #tpu.memory_space<vmem>>, vector<1x1x8x256xf32>,
    %c1_i32_37 = arith.constant 1 : i32
    return
  }
  func.func @transform_0(%arg0: i32, %arg1: memref<5xf32, #tpu.memory_space<smem>>) -> (i32, i32, i32, i32) {
    %c0_i32 = arith.constant 0 : i32
    %c0_i32_0 = arith.constant 0 : i32
    %c0_i32_1 = arith.constant 0 : i32
    %c0_i32_2 = arith.constant 0 : i32
    return %c0_i32, %arg0, %c0_i32_0, %c0_i32_1 : i32, i32, i32, i32
  }
  func.func @transform_1(%arg0: i32, %arg1: memref<5xf32, #tpu.memory_space<smem>>) -> (i32, i32, i32, i32) {
    %c0_i32 = arith.constant 0 : i32
    %c0_i32_0 = arith.constant 0 : i32
    %c0_i32_1 = arith.constant 0 : i32
    %c0_i32_2 = arith.constant 0 : i32
    return %c0_i32, %arg0, %c0_i32_0, %c0_i32_1 : i32, i32, i32, i32
  }
}

</mosaic_0001>

<llo_original>
// kernel: tpu_custom_call.1
$region0: #{tpu_custom_call.1}
  #allocation0 [shape = 'u32[]', space=smem, size = 0x4, offset = 0x4, fixed_abs, tag = 'smem constant byte address 0x4 - core index']
  #allocation1 [shape = 'u32[144,128]{1,0:T(1,128)}', space=vmem, size = 0x12000, scoped, tag = 'internal scratch']
  #allocation2 [shape = 's32[1]{0}', space=sflag, size = 0x4, scoped, tag = 'scoped memory for tpu_custom_call.1']
  #allocation3 [shape = 'u8[512]{0}', space=smem, size = 0x200, scoped, tag = 'prefetched SMEM operand 0']
  %s0 = inlined_call_operand.hbm [shape: f32[5], index: 0, kind: input, shape index: {}]
  %s1 = inlined_call_operand.hbm [shape: f32[5,1,8,256], index: 1, kind: input, shape index: {}]
  %s2 = inlined_call_operand.hbm [shape: f32[8,1,8,256], index: 2, kind: output, shape index: {}]
  %s3 = sld [smem:[#allocation0]]
  $region18: #{tpu_custom_call.1} parent=0
    _
  %s5 = ssub.s32 1, %s3
  %s6 = scalar_select 0, %s5, %s3
  %8 = dma.hbm_to_smem %s0, 16, [#allocation3], [#allocation2]
  %9 = dma.done [#allocation2], 16
  %10 = sfence
  $region1: #{tpu_custom_call.1} parent=0
    #allocation4 [shape = 'u8[40960]{0}', space=vmem, size = 0xa000, scoped, tag = 'input window, operand 1, single buffered']
    #allocation5 [shape = 's32[1]{0}', space=sflag, size = 0x4, scoped, tag = 'scoped memory for tpu_custom_call.1']
    #allocation6 [shape = 's32[1]{0}', space=sflag, size = 0x4, scoped, tag = 'scoped memory for tpu_custom_call.1']
    #allocation7 [shape = 'u8[65536]{0}', space=vmem, size = 0x10000, scoped, tag = 'output window, operand 0, single buffered']
    %11 = vsyncpa [#allocation5], 0
    %12 = vsyncpa [#allocation6], 0
    // Predicated region
    $region2: #{tpu_custom_call.1} parent=1 // pred_check
      _
    $region3: #{tpu_custom_call.1} parent=1 // pred_check_branch
      %14 = sbr.rel (0) target = $region5
    $region4: #{tpu_custom_call.1} parent=1 // pred_region
      %s16 = ssub.s32 1280, 1280
      %17 = vsyncadd [#allocation5], %s16
      %s18 = sshll.u32 [#allocation4], 4
      %s19 = int_to_ptr.vmem [resolvable:$true] %s18
      %24 = dma.hbm_to_vmem [thread:$0]  %s1, 1280, %s19, [#allocation5], 256, 256, 16
    $region5: #{tpu_custom_call.1} parent=1 // pred_fallthru
      _
    // Predicated region
    $region6: #{tpu_custom_call.1} parent=1 // pred_check
      _
    $region7: #{tpu_custom_call.1} parent=1 // pred_check_branch
      %26 = sbr.rel (0) target = $region9
    $region8: #{tpu_custom_call.1} parent=1 // pred_region
      %27 = dma.done [#allocation5], 1280
    $region9: #{tpu_custom_call.1} parent=1 // pred_fallthru
      _
    %s28 = sld [smem:[#allocation3]]
    %v29 = vstv %s28
    %s30 = sld [smem:[#allocation3 + $0x1]]
    %v31 = vstv %s30
    %s32 = sld [smem:[#allocation3 + $0x2]]
    %v33 = vstv %s32
    %s34 = sld [smem:[#allocation3 + $0x3]]
    %v35 = vstv %s34
    %s36 = sld [smem:[#allocation3 + $0x4]]
    %v37 = vstv %s36
    %v38 = vld [vmem:[#allocation4] sm:$0xff]
    %v39 = vld [vmem:[#allocation4 + $0x8] sm:$0xff]
    %v40 = vmul.f32 %v38, %v29
    %v41 = vmul.f32 %v39, %v29
    %v42 = vmul.f32 %v31, 0.0
    %v43 = vadd.f32 %v40, %v42
    %v44 = vadd.f32 %v41, %v42
    %v45 = vadd.f32 %v43, %v33
    %v46 = vadd.f32 %v44, %v33
    %v47 = vtanh.pop %v45
    %v48 = vtanh.pop %v46
    %s49 = scalar_lea.vmem [#allocation4], 16
    %v50 = vld [vmem:[%s49] sm:$0xff]
    %v51 = vld [vmem:[%s49 + $0x8] sm:$0xff]
    %v52 = vmul.f32 %v50, %v29
    %v53 = vmul.f32 %v51, %v29
    %v54 = vmul.f32 %v47, %v31
    %v55 = vmul.f32 %v48, %v31
    %v56 = vadd.f32 %v52, %v54
    %v57 = vadd.f32 %v53, %v55
    %v58 = vadd.f32 %v56, %v33
    %v59 = vadd.f32 %v57, %v33
    %v60 = vtanh.pop %v58
    %v61 = vtanh.pop %v59
    %s62 = scalar_lea.vmem [#allocation4], 32
    %v63 = vld [vmem:[%s62] sm:$0xff]
    %v64 = vld [vmem:[%s62 + $0x8] sm:$0xff]
    %v65 = vmul.f32 %v63, %v29
    %v66 = vmul.f32 %v64, %v29
    %v67 = vmul.f32 %v60, %v31
    %v68 = vmul.f32 %v61, %v31
    %v69 = vadd.f32 %v65, %v67
    %v70 = vadd.f32 %v66, %v68
    %v71 = vadd.f32 %v69, %v33
    %v72 = vadd.f32 %v70, %v33
    %v73 = vtanh.pop %v71
    %v74 = vtanh.pop %v72
    %s75 = scalar_lea.vmem [#allocation4], 48
    %v76 = vld [vmem:[%s75] sm:$0xff]
    %v77 = vld [vmem:[%s75 + $0x8] sm:$0xff]
    %v78 = vmul.f32 %v76, %v29
    %v79 = vmul.f32 %v77, %v29
    %v80 = vmul.f32 %v73, %v31
    %v81 = vmul.f32 %v74, %v31
    %v82 = vadd.f32 %v78, %v80
    %v83 = vadd.f32 %v79, %v81
    %v84 = vadd.f32 %v82, %v33
    %v85 = vadd.f32 %v83, %v33
    %v86 = vtanh.pop %v84
    %v87 = vtanh.pop %v85
    %s88 = scalar_lea.vmem [#allocation4], 64
    %v89 = vld [vmem:[%s88] sm:$0xff]
    %v90 = vld [vmem:[%s88 + $0x8] sm:$0xff]
    %v91 = vmul.f32 %v89, %v29
    %v92 = vmul.f32 %v90, %v29
    %v93 = vmul.f32 %v86, %v31
    %v94 = vmul.f32 %v87, %v31
    %v95 = vadd.f32 %v91, %v93
    %v96 = vadd.f32 %v92, %v94
    %v97 = vadd.f32 %v95, %v33
    %v98 = vadd.f32 %v96, %v33
    %v99 = vtanh.pop %v97
    %v100 = vtanh.pop %v98
    %v101 = vmul.f32 %v99, %v35
    %v102 = vmul.f32 %v100, %v35
    %v103 = vadd.f32 %v101, %v37
    %v104 = vadd.f32 %v102, %v37
    %105 = vst [vmem:[#allocation7] sm:$0xff] %v103
    %106 = vst [vmem:[#allocation7 + $0x8] sm:$0xff] %v104
    %v107 = vmul.f32 %v103, %v29
    %v108 = vmul.f32 %v104, %v29
    %v109 = vmul.f32 %v99, %v31
    %v110 = vmul.f32 %v100, %v31
    %v111 = vadd.f32 %v107, %v109
    %v112 = vadd.f32 %v108, %v110
    %v113 = vadd.f32 %v111, %v33
    %v114 = vadd.f32 %v112, %v33
    %v115 = vtanh.pop %v113
    %v116 = vtanh.pop %v114
    %v117 = vmul.f32 %v115, %v35
    %v118 = vmul.f32 %v116, %v35
    %v119 = vadd.f32 %v117, %v37
    %v120 = vadd.f32 %v118, %v37
    %s121 = scalar_lea.vmem [#allocation7], 16
    %122 = vst [vmem:[%s121] sm:$0xff] %v119
    %123 = vst [vmem:[%s121 + $0x8] sm:$0xff] %v120
    %v124 = vmul.f32 %v119, %v29
    %v125 = vmul.f32 %v120, %v29
    %v126 = vmul.f32 %v115, %v31
    %v127 = vmul.f32 %v116, %v31
    %v128 = vadd.f32 %v124, %v126
    %v129 = vadd.f32 %v125, %v127
    %v130 = vadd.f32 %v128, %v33
    %v131 = vadd.f32 %v129, %v33
    %v132 = vtanh.pop %v130
    %v133 = vtanh.pop %v131
    %v134 = vmul.f32 %v132, %v35
    %v135 = vmul.f32 %v133, %v35
    %v136 = vadd.f32 %v134, %v37
    %v137 = vadd.f32 %v135, %v37
    %s138 = scalar_lea.vmem [#allocation7], 32
    %139 = vst [vmem:[%s138] sm:$0xff] %v136
    %140 = vst [vmem:[%s138 + $0x8] sm:$0xff] %v137
    %v141 = vmul.f32 %v136, %v29
    %v142 = vmul.f32 %v137, %v29
    %v143 = vmul.f32 %v132, %v31
    %v144 = vmul.f32 %v133, %v31
    %v145 = vadd.f32 %v141, %v143
    %v146 = vadd.f32 %v142, %v144
    %v147 = vadd.f32 %v145, %v33
    %v148 = vadd.f32 %v146, %v33
    %v149 = vtanh.pop %v147
    %v150 = vtanh.pop %v148
    %v151 = vmul.f32 %v149, %v35
    %v152 = vmul.f32 %v150, %v35
    %v153 = vadd.f32 %v151, %v37
    %v154 = vadd.f32 %v152, %v37
    %s155 = scalar_lea.vmem [#allocation7], 48
    %156 = vst [vmem:[%s155] sm:$0xff] %v153
    %157 = vst [vmem:[%s155 + $0x8] sm:$0xff] %v154
    %v158 = vmul.f32 %v153, %v29
    %v159 = vmul.f32 %v154, %v29
    %v160 = vmul.f32 %v149, %v31
    %v161 = vmul.f32 %v150, %v31
    %v162 = vadd.f32 %v158, %v160
    %v163 = vadd.f32 %v159, %v161
    %v164 = vadd.f32 %v162, %v33
    %v165 = vadd.f32 %v163, %v33
    %v166 = vtanh.pop %v164
    %v167 = vtanh.pop %v165
    %v168 = vmul.f32 %v166, %v35
    %v169 = vmul.f32 %v167, %v35
    %v170 = vadd.f32 %v168, %v37
    %v171 = vadd.f32 %v169, %v37
    %s172 = scalar_lea.vmem [#allocation7], 64
    %173 = vst [vmem:[%s172] sm:$0xff] %v170
    %174 = vst [vmem:[%s172 + $0x8] sm:$0xff] %v171
    %v175 = vmul.f32 %v170, %v29
    %v176 = vmul.f32 %v171, %v29
    %v177 = vmul.f32 %v166, %v31
    %v178 = vmul.f32 %v167, %v31
    %v179 = vadd.f32 %v175, %v177
    %v180 = vadd.f32 %v176, %v178
    %v181 = vadd.f32 %v179, %v33
    %v182 = vadd.f32 %v180, %v33
    %v183 = vtanh.pop %v181
    %v184 = vtanh.pop %v182
    %v185 = vmul.f32 %v183, %v35
    %v186 = vmul.f32 %v184, %v35
    %v187 = vadd.f32 %v185, %v37
    %v188 = vadd.f32 %v186, %v37
    %s189 = scalar_lea.vmem [#allocation7], 80
    %190 = vst [vmem:[%s189] sm:$0xff] %v187
    %191 = vst [vmem:[%s189 + $0x8] sm:$0xff] %v188
    %v192 = vmul.f32 %v187, %v29
    %v193 = vmul.f32 %v188, %v29
    %v194 = vmul.f32 %v183, %v31
    %v195 = vmul.f32 %v184, %v31
    %v196 = vadd.f32 %v192, %v194
    %v197 = vadd.f32 %v193, %v195
    %v198 = vadd.f32 %v196, %v33
    %v199 = vadd.f32 %v197, %v33
    %v200 = vtanh.pop %v198
    %v201 = vtanh.pop %v199
    %v202 = vmul.f32 %v200, %v35
    %v203 = vmul.f32 %v201, %v35
    %v204 = vadd.f32 %v202, %v37
    %v205 = vadd.f32 %v203, %v37
    %s206 = scalar_lea.vmem [#allocation7], 96
    %207 = vst [vmem:[%s206] sm:$0xff] %v204
    %208 = vst [vmem:[%s206 + $0x8] sm:$0xff] %v205
    %v209 = vmul.f32 %v204, %v29
    %v210 = vmul.f32 %v205, %v29
    %v211 = vmul.f32 %v200, %v31
    %v212 = vmul.f32 %v201, %v31
    %v213 = vadd.f32 %v209, %v211
    %v214 = vadd.f32 %v210, %v212
    %v215 = vadd.f32 %v213, %v33
    %v216 = vadd.f32 %v214, %v33
    %v217 = vtanh.pop %v215
    %v218 = vtanh.pop %v216
    %v219 = vmul.f32 %v217, %v35
    %v220 = vmul.f32 %v218, %v35
    %v221 = vadd.f32 %v219, %v37
    %v222 = vadd.f32 %v220, %v37
    %s223 = scalar_lea.vmem [#allocation7], 112
    %224 = vst [vmem:[%s223] sm:$0xff] %v221
    %225 = vst [vmem:[%s223 + $0x8] sm:$0xff] %v222
    // Predicated region
    $region10: #{tpu_custom_call.1} parent=1 // pred_check
      _
    $region11: #{tpu_custom_call.1} parent=1 // pred_check_branch
      %227 = sbr.rel (0) target = $region13
    $region12: #{tpu_custom_call.1} parent=1 // pred_region
      %s229 = ssub.s32 2048, 2048
      %230 = vsyncadd [#allocation6], %s229
      %s231 = sshll.u32 [#allocation7], 4
      %s232 = int_to_ptr.vmem [resolvable:$true] %s231
      %237 = dma.vmem_to_hbm [thread:$0]  %s232, 2048, %s2, [#allocation6], 256, 256, 16
    $region13: #{tpu_custom_call.1} parent=1 // pred_fallthru
      _
    // Predicated region
    $region14: #{tpu_custom_call.1} parent=1 // pred_check
      _
    $region15: #{tpu_custom_call.1} parent=1 // pred_check_branch
      %239 = sbr.rel (0) target = $region17
    $region16: #{tpu_custom_call.1} parent=1 // pred_region
      %240 = dma.done [#allocation6], 2048
    $region17: #{tpu_custom_call.1} parent=1 // pred_fallthru
      _
    %241 = vsyncpa [#allocation5], 1
    %242 = vsyncpa [#allocation6], 1

</llo_original>
